<compile_context>
chip_gen: v7x
topology: tpu7x:2x2x1
jax: 0.10.0
libtpu: 0.0.40
codegen_flags: <defaults>
</compile_context>

<pallas_src>
import functools

import jax
import jax.numpy as jnp
from jax.experimental import pallas as pl
from jax.experimental.pallas import tpu as pltpu


def _gap_kernel(x_ref, o_ref, acc_ref, *, inv_hw, use_mxu):
    """Partial global-average-pool reduction over the lane (spatial) axis.

    x_ref:   (rows_t, hwt)    input tile ((n, c) rows on sublanes, HW on lanes)
    o_ref:   (rows_t, 1)      output block, resident across the reduction axis
    acc_ref: (rows_t, 1) f32  accumulator scratch
    """
    j = pl.program_id(1)

    @pl.when(j == 0)
    def _init():
        acc_ref[...] = jnp.zeros_like(acc_ref)

    x = x_ref[...]
    if use_mxu:
        # MXU ones-vector contraction with f32 accumulation: avoids the
        # explicit f32 upcast (vreg traffic) for narrow dtypes.
        ones = jnp.ones((x.shape[-1], 1), dtype=x.dtype)
        partial = jnp.dot(x, ones, preferred_element_type=jnp.float32)
    else:
        partial = jnp.sum(x.astype(jnp.float32), axis=-1, keepdims=True)
    acc_ref[...] += partial

    @pl.when(j == pl.num_programs(1) - 1)
    def _finalize():
        o_ref[...] = (acc_ref[...] * inv_hw).astype(o_ref.dtype)


def _vmem_capacity_bytes():
    try:
        return int(pltpu.get_tpu_info().vmem_capacity_bytes)
    except Exception:
        return 64 * 2**20  # conservative fallback (v7x per-TC VMEM)


def _largest_aligned_divisor(total, align, limit):
    """Largest d <= limit with d % align == 0 and total % d == 0, else None."""
    hi = min(int(limit), int(total)) // align
    for k in range(hi, 0, -1):
        d = k * align
        if total % d == 0:
            return d
    return None


def _make_input_spec(rows_t, hwt, buf_count):
    idx = lambda i, j: (i, j)
    if buf_count != 2 and hasattr(pl, "Buffered"):
        try:
            return pl.BlockSpec((rows_t, hwt), idx,
                                pipeline_mode=pl.Buffered(buf_count))
        except TypeError:
            pass  # older BlockSpec signature: fall back to default depth
    return pl.BlockSpec((rows_t, hwt), idx)


def avg_pooling(x_nchw, feature_size=None, *, rows_t=None, hwt=None):
    """Pallas equivalent of AvgPooling.forward: (N, C, H, W) -> (-1, feature_size)."""
    N, C, H, W = x_nchw.shape
    if feature_size is None:
        feature_size = C
    rows = N * C
    HW = H * W
    assert rows % feature_size == 0, (
        "N*C must be divisible by feature_size (same requirement as torch .view)")

    x2 = x_nchw.reshape(rows, HW)
    dsize = jnp.dtype(x_nchw.dtype).itemsize

    # ---- generation-aware VMEM planning budget ----
    vmem_cap = _vmem_capacity_bytes()                 # 64 MiB v7x, 128 MiB v5e/v6e
    budget = int(min(100 * 2**20, 0.70 * vmem_cap))   # ~44 MiB v7x, ~90 MiB v5e/v6e
    input_budget = budget // 2                        # double-buffered input share

    # ---- row (parallel) tile: pack (n, c) pairs onto sublanes ----
    align = {4: 8, 2: 16, 1: 32}.get(dsize, 8)        # sublane packing per dtype
    if rows % align != 0:
        align = 8
    if rows_t is None:
        if rows % align == 0:
            if rows >= 64:
                target = rows // 4                    # >=4 parallel steps (v7x 2 TCs)
            elif rows >= 16:
                target = rows // 2                    # >=2 parallel steps
            else:
                target = rows
            target = min(target, 1024)
            rows_t = _largest_aligned_divisor(rows, align, target) or rows
        else:
            rows_t = rows

    # ---- spatial (reduction) tile: lane-dense, budget-aware ----
    if hwt is None:
        if 2 * rows_t * HW * dsize <= input_budget or HW % 128 != 0:
            hwt = HW                                  # single pass, contiguous DMA
        else:
            max_elems = input_budget // (2 * rows_t * dsize)
            lane_cap = 1024 if vmem_cap <= 64 * 2**20 else 2048  # smaller on v7x
            hwt = _largest_aligned_divisor(HW, 128, min(max_elems, lane_cap)) or HW

    grid = (rows // rows_t, HW // hwt)                # reduction axis innermost
    tile_bytes = rows_t * hwt * dsize

    # Third input buffer when cheap and useful (mostly v5e/v6e, small tiles).
    buf_count = 2
    if (grid[0] * grid[1] >= 3
            and 3 * tile_bytes <= input_budget
            and (vmem_cap > 64 * 2**20 or tile_bytes <= 8 * 2**20)):
        buf_count = 3

    # Honest VMEM limit: input buffers + (double-buffered) output + scratch + slack.
    need = buf_count * tile_bytes + 2 * rows_t * dsize + rows_t * 4 + 2 * 2**20
    hard_cap = int(min(100 * 2**20, 0.95 * vmem_cap))
    vmem_limit = int(min(hard_cap, max(4 * 2**20, need)))

    use_mxu = x_nchw.dtype in (jnp.bfloat16, jnp.float16)
    kernel = functools.partial(_gap_kernel, inv_hw=1.0 / float(HW), use_mxu=use_mxu)

    out2d = pl.pallas_call(
        kernel,
        out_shape=jax.ShapeDtypeStruct((rows, 1), x_nchw.dtype),
        grid=grid,
        in_specs=[_make_input_spec(rows_t, hwt, buf_count)],
        out_specs=pl.BlockSpec((rows_t, 1), lambda i, j: (i, 0)),
        scratch_shapes=[pltpu.VMEM((rows_t, 1), jnp.float32)],
        compiler_params=pltpu.CompilerParams(
            dimension_semantics=("parallel", "arbitrary"),
            vmem_limit_bytes=vmem_limit,
        ),
    )(x2)

    # .view(-1, feature_size) from the PyTorch module.
    return out2d.reshape(-1, feature_size)


def reference(x, feature_size):
    return jnp.mean(x.astype(jnp.float32), axis=(2, 3)).reshape(-1, feature_size)


if __name__ == "__main__":
    # Small shapes consistent with the module: batch=2, channels=4, spatial=16.
    N, C, H, W = 2, 4, 16, 16
    feature_size = C

    key = jax.random.PRNGKey(0)
    x = jax.random.normal(key, (N, C, H, W), dtype=jnp.float32)

    out = jax.block_until_ready(avg_pooling(x, feature_size))
    ref = reference(x, feature_size)
    assert out.shape == (N, feature_size)
    assert jnp.allclose(out, ref, atol=1e-5, rtol=1e-5)

    # Multi-step spatial reduction + multi-row-tile path (accumulator & deeper buffering).
    x2 = jax.random.normal(jax.random.PRNGKey(1), (2, 8, 32, 32), dtype=jnp.float32)
    out2 = jax.block_until_ready(avg_pooling(x2, 8, hwt=256))
    ref2 = reference(x2, 8)
    assert jnp.allclose(out2, ref2, atol=1e-5, rtol=1e-5)

    # bf16 path (MXU ones-vector contraction, f32 accumulation).
    x3 = jax.random.normal(jax.random.PRNGKey(2), (2, 8, 16, 16), dtype=jnp.bfloat16)
    out3 = jax.block_until_ready(avg_pooling(x3, 8))
    ref3 = reference(x3, 8)
    assert jnp.allclose(out3.astype(jnp.float32), ref3, atol=3e-2, rtol=3e-2)

    print("KERNEL_OK")
</pallas_src>

<mosaic_0001>
module attributes {stable_mosaic.version = 11 : i64} {
  func.func @_gap_kernel(%arg0: i32, %arg1: i32, %arg2: memref<8x256xf32, #tpu.memory_space<vmem>>, %arg3: memref<8x1xf32, #tpu.memory_space<vmem>>, %arg4: memref<8x1xf32, #tpu.memory_space<vmem>>) attributes {dimension_semantics = [#tpu.dimension_semantics<parallel>, #tpu.dimension_semantics<arbitrary>], iteration_bounds = array<i64: 1, 1>, scalar_prefetch = 0 : i64, scratch_operands = 1 : i64, tpu.core_type = #tpu.core_type<tc>, window_params = [{transform_indices = @transform_0, window_bounds = array<i64: 8, 256>}, {transform_indices = @transform_1, window_bounds = array<i64: 8, 1>}]} {
    %c0_i32 = arith.constant 0 : i32
    %0 = arith.cmpi eq, %arg1, %c0_i32 : i32
    %1 = arith.extui %0 : i1 to i32
    %c0_i32_0 = arith.constant 0 : i32
    %2 = arith.cmpi ne, %1, %c0_i32_0 : i32
    scf.if %2 {
      %cst_8 = arith.constant 0.000000e+00 : f32
      %12 = vector.broadcast %cst_8 : f32 to vector<8x1xf32>
      %c0_9 = arith.constant 0 : index
      %c0_10 = arith.constant 0 : index
      %13 = vector.load %arg4[%c0_9, %c0_10] : memref<8x1xf32, #tpu.memory_space<vmem>>, vector<8x1xf32>
      tpu.vector_store %arg4[%c0_9, %c0_10], %12 {strides = array<i32>} : memref<8x1xf32, #tpu.memory_space<vmem>>, vector<8x1xf32>,
    } else {
    }
    %c0 = arith.constant 0 : index
    %c0_1 = arith.constant 0 : index
    %3 = vector.load %arg2[%c0, %c0_1] : memref<8x256xf32, #tpu.memory_space<vmem>>, vector<8x256xf32>
    %cst = arith.constant dense<0.000000e+00> : vector<8xf32>
    %4 = vector.multi_reduction <add>, %3, %cst [1] : vector<8x256xf32> to vector<8xf32>
    %5 = vector.shape_cast %4 : vector<8xf32> to vector<8x1xf32>
    %c0_2 = arith.constant 0 : index
    %c0_3 = arith.constant 0 : index
    %6 = vector.load %arg4[%c0_2, %c0_3] : memref<8x1xf32, #tpu.memory_space<vmem>>, vector<8x1xf32>
    %7 = arith.addf %6, %5 : vector<8x1xf32>
    %c0_4 = arith.constant 0 : index
    %c0_5 = arith.constant 0 : index
    %8 = vector.load %arg4[%c0_4, %c0_5] : memref<8x1xf32, #tpu.memory_space<vmem>>, vector<8x1xf32>
    tpu.vector_store %arg4[%c0_4, %c0_5], %7 {strides = array<i32>} : memref<8x1xf32, #tpu.memory_space<vmem>>, vector<8x1xf32>,
    %c0_i32_6 = arith.constant 0 : i32
    %9 = arith.cmpi eq, %arg1, %c0_i32_6 : i32
    %10 = arith.extui %9 : i1 to i32
    %c0_i32_7 = arith.constant 0 : i32
    %11 = arith.cmpi ne, %10, %c0_i32_7 : i32
    scf.if %11 {
      %c0_8 = arith.constant 0 : index
      %c0_9 = arith.constant 0 : index
      %12 = vector.load %arg4[%c0_8, %c0_9] : memref<8x1xf32, #tpu.memory_space<vmem>>, vector<8x1xf32>
      %cst_10 = arith.constant 3.906250e-03 : f32
      %13 = vector.broadcast %cst_10 : f32 to vector<8x1xf32>
      %14 = arith.mulf %12, %13 : vector<8x1xf32>
      %c0_11 = arith.constant 0 : index
      %c0_12 = arith.constant 0 : index
      %15 = vector.load %arg3[%c0_11, %c0_12] : memref<8x1xf32, #tpu.memory_space<vmem>>, vector<8x1xf32>
      tpu.vector_store %arg3[%c0_11, %c0_12], %14 {strides = array<i32>} : memref<8x1xf32, #tpu.memory_space<vmem>>, vector<8x1xf32>,
    } else {
    }
    return
  }
  func.func @transform_0(%arg0: i32, %arg1: i32) -> (i32, i32) {
    %c0_i32 = arith.constant 0 : i32
    return %arg0, %arg1 : i32, i32
  }
  func.func @transform_1(%arg0: i32, %arg1: i32) -> (i32, i32) {
    %c0_i32 = arith.constant 0 : i32
    %c0_i32_0 = arith.constant 0 : i32
    return %arg0, %c0_i32 : i32, i32
  }
}

</mosaic_0001>

<llo_original>
// kernel: tpu_custom_call.1
$region0: #{tpu_custom_call.1}
  #allocation0 [shape = 'u32[]', space=smem, size = 0x4, offset = 0x4, fixed_abs, tag = 'smem constant byte address 0x4 - core index']
  #allocation1 [shape = 'u32[144,128]{1,0:T(1,128)}', space=vmem, size = 0x12000, scoped, tag = 'internal scratch']
  #allocation2 [shape = 'f32[8,1]{1,0:T(8,128)}', space=vmem, size = 0x1000, scoped, tag = 'scratch operand']
  %s0 = inlined_call_operand.hbm [shape: f32[8,256], index: 0, kind: input, shape index: {}]
  %s1 = inlined_call_operand.vmem [shape: f32[8,1], index: 1, kind: output, shape index: {}]
  %s2 = sld [smem:[#allocation0]]
  $region26: #{tpu_custom_call.1} parent=0
    _
  %s4 = ssub.s32 1, %s2
  %s5 = scalar_select 0, %s4, %s2
  $region1: #{tpu_custom_call.1} parent=0
    #allocation3 [shape = 'u8[8192]{0}', space=vmem, size = 0x2000, scoped, tag = 'input window, operand 0, single buffered']
    #allocation4 [shape = 's32[1]{0}', space=sflag, size = 0x4, scoped, tag = 'scoped memory for tpu_custom_call.1']
    %6 = vsyncpa [#allocation4], 0
    // Predicated region
    $region2: #{tpu_custom_call.1} parent=1 // pred_check
      _
    $region3: #{tpu_custom_call.1} parent=1 // pred_check_branch
      %8 = sbr.rel (0) target = $region5
    $region4: #{tpu_custom_call.1} parent=1 // pred_region
      %s10 = ssub.s32 256, 256
      %11 = vsyncadd [#allocation4], %s10
      %s13 = sshll.u32 [#allocation3], 4
      %s14 = int_to_ptr.vmem [resolvable:$true] %s13
      %16 = dma.hbm_to_vmem [thread:$0]  %s0, 256, %s14, [#allocation4]
    $region5: #{tpu_custom_call.1} parent=1 // pred_fallthru
      _
    // Predicated region
    $region6: #{tpu_custom_call.1} parent=1 // pred_check
      _
    $region7: #{tpu_custom_call.1} parent=1 // pred_check_branch
      %18 = sbr.rel (0) target = $region9
    $region8: #{tpu_custom_call.1} parent=1 // pred_region
      %19 = dma.done [#allocation4], 256
    $region9: #{tpu_custom_call.1} parent=1 // pred_fallthru
      _
    %p20 = scmp.eq.s32.totalorder 0, 0
    // Predicated region
    $region10: #{tpu_custom_call.1} parent=1 // pred_check
      %p21 = pneg %p20
    $region11: #{tpu_custom_call.1} parent=1 // pred_check_branch
      %23 = sbr.rel (%p21) target = $region13
    $region12: #{tpu_custom_call.1} parent=1 // pred_region
      %vm24 = vcmask 7168
      %25 = vst.msk [vmem:[#allocation2] sm:$0xff] %vm24, 0.0
    $region13: #{tpu_custom_call.1} parent=1 // pred_fallthru
      _
    %v26 = vld [vmem:[#allocation3] sm:$0xff]
    %v27 = vld [vmem:[#allocation3 + $0x8] sm:$0xff]
    %v28 = vadd.f32 %v26, %v27
    %29 = vadd.xlane.f32.xlu0 %v28
    %v30 = vpop.xlane.xlu0 %29
    %v31 = vld [vmem:[#allocation2] sm:$0xff]
    %v32 = vadd.f32 %v31, %v30
    %vm33 = vcmask 7168
    %34 = vst.msk [vmem:[#allocation2] sm:$0xff] %vm33, %v32
    // Predicated region
    $region14: #{tpu_custom_call.1} parent=1 // pred_check
      %p35 = pneg %p20
    $region15: #{tpu_custom_call.1} parent=1 // pred_check_branch
      %37 = sbr.rel (%p35) target = $region17
    $region16: #{tpu_custom_call.1} parent=1 // pred_region
      %v38 = vld [vmem:[#allocation2] sm:$0xff]
      %v39 = vmul.f32 %v38, 0.00390625
      %40 = vst.msk [vmem:[%s1] sm:$0xff] %vm33, %v39
    $region17: #{tpu_custom_call.1} parent=1 // pred_fallthru
      _
    // Predicated region
    $region18: #{tpu_custom_call.1} parent=1 // pred_check
      _
    $region19: #{tpu_custom_call.1} parent=1 // pred_check_branch
      %42 = sbr.rel (0) target = $region21
    $region20: #{tpu_custom_call.1} parent=1 // pred_region
      _
    $region21: #{tpu_custom_call.1} parent=1 // pred_fallthru
      _
    // Predicated region
    $region22: #{tpu_custom_call.1} parent=1 // pred_check
      _
    $region23: #{tpu_custom_call.1} parent=1 // pred_check_branch
      %44 = sbr.rel (0) target = $region25
    $region24: #{tpu_custom_call.1} parent=1 // pred_region
      _
    $region25: #{tpu_custom_call.1} parent=1 // pred_fallthru
      _
    %45 = vsyncpa [#allocation4], 1

</llo_original>
